<compile_context>
chip_gen: v7x
topology: tpu7x:2x2x1
jax: 0.10.0
libtpu: 0.0.40
codegen_flags: <defaults>
</compile_context>

<pallas_src>
import functools

import jax
import jax.numpy as jnp
from jax.experimental import pallas as pl
from jax.experimental.pallas import tpu as pltpu


def _nfl_kernel(pred_ref, label_ref, out_ref, s_acc, b_acc, w_acc, *,
                alpha, gamma, eps, ignore_label, weight, size_average,
                from_logits):
    # pred_ref/label_ref blocks: (C, T)  (batch dim squeezed)
    # out_ref block: (1, 1, 1); accumulators: (C, 1) f32 VMEM scratch.
    t = pl.program_id(1)

    @pl.when(t == 0)
    def _init():
        s_acc[...] = jnp.zeros_like(s_acc)
        b_acc[...] = jnp.zeros_like(b_acc)
        w_acc[...] = jnp.zeros_like(w_acc)

    pred = pred_ref[...].astype(jnp.float32)
    label = label_ref[...].astype(jnp.float32)

    one_hot = label > 0.5
    valid = label != ignore_label            # sample_weight (bool)
    sw = valid.astype(jnp.float32)

    if not from_logits:
        pred = jax.nn.sigmoid(pred)           # EUP path; free-ish vs HBM BW

    # alpha_t carries the sample_weight factor, so the reference's extra
    # `loss * sample_weight` is a no-op.
    alpha_t = sw * jnp.where(one_hot, alpha, 1.0 - alpha)
    pt = jnp.where(valid, 1.0 - jnp.abs(label - pred), jnp.ones_like(pred))

    one_minus_pt = 1.0 - pt
    if gamma == 2:                            # a multiply, never exp/log pow
        beta = one_minus_pt * one_minus_pt
    elif float(gamma) == int(gamma) and int(gamma) >= 0:
        beta = one_minus_pt ** int(gamma)
    else:
        beta = one_minus_pt ** float(gamma)

    log_pt = jnp.log(jnp.minimum(pt + eps, 1.0))
    s_elem = -alpha_t * beta * log_pt

    # Per-channel spatial partial sums for this tile (XLU lane reductions).
    s_acc[...] += jnp.sum(s_elem, axis=-1, keepdims=True)
    b_acc[...] += jnp.sum(beta, axis=-1, keepdims=True)
    w_acc[...] += jnp.sum(sw, axis=-1, keepdims=True)

    @pl.when(t == pl.num_programs(1) - 1)
    def _finalize():
        S = s_acc[...]                        # (C, 1)
        Bc = b_acc[...]
        Wc = w_acc[...]
        mult = Wc / (Bc + eps)                # detach_delimeter: fwd unchanged
        loss_sum = jnp.sum(S * mult)
        if size_average:
            bsum = jnp.sum(Wc)                # reuse accumulated W_c
            out_val = weight * loss_sum / (bsum + eps)
        else:
            out_val = weight * loss_sum
        out_ref[...] = out_val.reshape(1, 1, 1).astype(out_ref.dtype)


def _largest_lane_divisor(hw_base, cap):
    """Largest multiple of 128 that divides hw_base (a multiple of 128), <= cap."""
    n = hw_base // 128
    k_max = max(1, min(cap // 128, n))
    for k in range(k_max, 0, -1):
        if n % k == 0:
            return 128 * k
    return 128


def normalized_focal_loss_sigmoid(pred, label, *, alpha=0.25, gamma=2,
                                  eps=1e-12, ignore_label=-1, weight=1.0,
                                  size_average=True, from_logits=False,
                                  max_mult=-1, tile_budget_elems=512 * 1024,
                                  tile_lanes=None):
    """pred, label: (B, C, H, W).  Returns the per-batch loss, shape (B,).

    pred may be float32 or bfloat16; label may be float or integer typed.
    `tile_lanes` (optional) forces a specific spatial tile width (testing).
    """
    if max_mult > 0:
        # TODO(synk): clamp_max(beta * mult, max_mult) is incompatible with the
        # single-pass factoring; only the default (max_mult <= 0) is supported.
        raise NotImplementedError("max_mult > 0 is not supported by this kernel")

    B, C, H, W = pred.shape
    HW = H * W

    # Lane-dense layout: fold the spatial dims (contiguous in NCHW -> free).
    pred2 = pred.reshape(B, C, HW)
    label2 = label.reshape(B, C, HW)

    # ---- Choose the spatial tile T ----
    if (tile_lanes is None and C * HW <= tile_budget_elems) or HW <= 128:
        # Whole spatial extent fits in one block: no 128-multiple constraint
        # (block equals full dims), no padding, single grid step per batch.
        T = HW
        HW_pad = HW
    else:
        if tile_lanes is not None:
            cap = int(tile_lanes)
        else:
            cap = tile_budget_elems // max(C, 1)
        cap = max(128, (cap // 128) * 128)
        hw_base = int(pl.cdiv(HW, 128)) * 128
        # Prefer an exact divisor of hw_base: avoids an extra jnp.pad copy
        # (which would double HBM traffic) whenever HW is 128-aligned.
        T = _largest_lane_divisor(hw_base, cap)
        if T < min(cap, 1024):
            # Only tiny divisors exist -> too many grid steps; pay for one
            # pad-copy and use the full-budget tile instead.
            T = cap
            hw_base = int(pl.cdiv(HW, T)) * T
        HW_pad = hw_base

    if HW_pad != HW:
        pad = int(HW_pad - HW)
        # Padded pixels get label == ignore_label -> sw = 0, beta = 0, loss = 0.
        pred2 = jnp.pad(pred2, ((0, 0), (0, 0), (0, pad)))
        label2 = jnp.pad(label2, ((0, 0), (0, 0), (0, pad)),
                         constant_values=ignore_label)
    num_tiles = HW_pad // T

    kernel = functools.partial(
        _nfl_kernel, alpha=float(alpha), gamma=gamma, eps=float(eps),
        ignore_label=ignore_label, weight=float(weight),
        size_average=size_average, from_logits=from_logits)

    out = pl.pallas_call(
        kernel,
        out_shape=jax.ShapeDtypeStruct((B, 1, 1), jnp.float32),
        grid_spec=pltpu.PrefetchScalarGridSpec(
            num_scalar_prefetch=0,
            grid=(B, num_tiles),
            in_specs=[
                pl.BlockSpec((None, C, T), lambda b, t: (b, 0, t)),
                pl.BlockSpec((None, C, T), lambda b, t: (b, 0, t)),
            ],
            out_specs=pl.BlockSpec((1, 1, 1), lambda b, t: (b, 0, 0)),
            scratch_shapes=[
                pltpu.VMEM((C, 1), jnp.float32),   # S_c
                pltpu.VMEM((C, 1), jnp.float32),   # B_c (beta sum)
                pltpu.VMEM((C, 1), jnp.float32),   # W_c (sample-weight sum)
            ],
        ),
        compiler_params=pltpu.CompilerParams(
            dimension_semantics=("parallel", "arbitrary")),
    )(pred2, label2)
    return out.reshape(B)


def _reference(pred, label, *, alpha=0.25, gamma=2, eps=1e-12,
               ignore_label=-1, weight=1.0):
    """Pure-JAX reference mirroring the PyTorch forward."""
    pred = pred.astype(jnp.float32)
    label = label.astype(jnp.float32)
    one_hot = label > 0.5
    sw = (label != ignore_label).astype(jnp.float32)
    p = jax.nn.sigmoid(pred)
    a = jnp.where(one_hot, alpha * sw, (1.0 - alpha) * sw)
    pt = jnp.where(sw > 0, 1.0 - jnp.abs(label - p), jnp.ones_like(p))
    beta = (1.0 - pt) ** gamma
    sw_sum = jnp.sum(sw, axis=(-2, -1), keepdims=True)
    beta_sum = jnp.sum(beta, axis=(-2, -1), keepdims=True)
    mult = sw_sum / (beta_sum + eps)
    beta = beta * mult
    loss = -a * beta * jnp.log(jnp.minimum(pt + eps, 1.0))
    loss = weight * (loss * sw)
    bsum = jnp.sum(sw, axis=(1, 2, 3))
    return jnp.sum(loss, axis=(1, 2, 3)) / (bsum + eps)


if __name__ == "__main__":
    key = jax.random.PRNGKey(0)
    k1, k2, k3 = jax.random.split(key, 3)

    B, C, H, W = 2, 4, 16, 16
    pred = jax.random.normal(k1, (B, C, H, W), dtype=jnp.float32)

    # Labels in {0, 1}, with some pixels set to the ignore value (-1).
    label = (jax.random.uniform(k2, (B, C, H, W)) > 0.5).astype(jnp.float32)
    ignore_mask = jax.random.uniform(k3, (B, C, H, W)) < 0.1
    label = jnp.where(ignore_mask, jnp.float32(-1.0), label)

    ref = _reference(pred, label)

    # Default (single-block) path.
    out_full = jax.block_until_ready(normalized_focal_loss_sigmoid(pred, label))
    assert out_full.shape == (B,)
    assert jnp.allclose(out_full, ref, rtol=1e-4, atol=1e-6), (out_full, ref)

    # Multi-tile streaming path (2 spatial tiles of 128 lanes each).
    out_tiled = jax.block_until_ready(
        normalized_focal_loss_sigmoid(pred, label, tile_lanes=128))
    assert jnp.allclose(out_tiled, ref, rtol=1e-4, atol=1e-6), (out_tiled, ref)

    # Odd spatial extent (H*W not a multiple of 128): single-block path and
    # padded multi-tile fallback path.
    H2, W2 = 16, 15
    pred_o = jax.random.normal(k1, (B, C, H2, W2), dtype=jnp.float32)
    label_o = (jax.random.uniform(k2, (B, C, H2, W2)) > 0.5).astype(jnp.float32)
    label_o = jnp.where(jax.random.uniform(k3, (B, C, H2, W2)) < 0.1,
                        jnp.float32(-1.0), label_o)
    ref_o = _reference(pred_o, label_o)
    out_o_full = jax.block_until_ready(
        normalized_focal_loss_sigmoid(pred_o, label_o))
    assert jnp.allclose(out_o_full, ref_o, rtol=1e-4, atol=1e-6), (out_o_full, ref_o)
    out_o_tiled = jax.block_until_ready(
        normalized_focal_loss_sigmoid(pred_o, label_o, tile_lanes=128))
    assert jnp.allclose(out_o_tiled, ref_o, rtol=1e-4, atol=1e-6), (out_o_tiled, ref_o)

    # bf16 pred (halves HBM traffic for this bandwidth-bound kernel); the
    # kernel upcasts to f32 internally, so it matches the f32 reference run
    # on the bf16-rounded inputs.
    pred_bf16 = pred.astype(jnp.bfloat16)
    ref_bf16 = _reference(pred_bf16.astype(jnp.float32), label)
    out_bf16 = jax.block_until_ready(
        normalized_focal_loss_sigmoid(pred_bf16, label, tile_lanes=128))
    assert jnp.allclose(out_bf16, ref_bf16, rtol=1e-4, atol=1e-6), (out_bf16, ref_bf16)

    print("KERNEL_OK")
</pallas_src>

<mosaic_0001>
module attributes {stable_mosaic.version = 11 : i64} {
  func.func @_nfl_kernel(%arg0: i32, %arg1: i32, %arg2: memref<1x4x256xf32, #tpu.memory_space<vmem>>, %arg3: memref<1x4x256xf32, #tpu.memory_space<vmem>>, %arg4: memref<1x1x1xf32, #tpu.memory_space<vmem>>, %arg5: memref<4x1xf32, #tpu.memory_space<vmem>>, %arg6: memref<4x1xf32, #tpu.memory_space<vmem>>, %arg7: memref<4x1xf32, #tpu.memory_space<vmem>>) attributes {dimension_semantics = [#tpu.dimension_semantics<parallel>, #tpu.dimension_semantics<arbitrary>], iteration_bounds = array<i64: 2, 1>, scalar_prefetch = 0 : i64, scratch_operands = 3 : i64, tpu.core_type = #tpu.core_type<tc>, window_params = [{transform_indices = @transform_0, window_bounds = array<i64: 1, 4, 256>}, {transform_indices = @transform_1, window_bounds = array<i64: 1, 4, 256>}, {transform_indices = @transform_2, window_bounds = array<i64: 1, 1, 1>}]} {
    %c0_i32 = arith.constant 0 : i32
    %0 = arith.cmpi eq, %arg1, %c0_i32 : i32
    %1 = arith.extui %0 : i1 to i32
    %c0_i32_0 = arith.constant 0 : i32
    %2 = arith.cmpi ne, %1, %c0_i32_0 : i32
    scf.if %2 {
      %cst_33 = arith.constant 0.000000e+00 : f32
      %58 = vector.broadcast %cst_33 : f32 to vector<4x1xf32>
      %c0_34 = arith.constant 0 : index
      %c0_35 = arith.constant 0 : index
      %59 = vector.load %arg5[%c0_34, %c0_35] : memref<4x1xf32, #tpu.memory_space<vmem>>, vector<4x1xf32>
      tpu.vector_store %arg5[%c0_34, %c0_35], %58 {strides = array<i32>} : memref<4x1xf32, #tpu.memory_space<vmem>>, vector<4x1xf32>,
      %cst_36 = arith.constant 0.000000e+00 : f32
      %60 = vector.broadcast %cst_36 : f32 to vector<4x1xf32>
      %c0_37 = arith.constant 0 : index
      %c0_38 = arith.constant 0 : index
      %61 = vector.load %arg6[%c0_37, %c0_38] : memref<4x1xf32, #tpu.memory_space<vmem>>, vector<4x1xf32>
      tpu.vector_store %arg6[%c0_37, %c0_38], %60 {strides = array<i32>} : memref<4x1xf32, #tpu.memory_space<vmem>>, vector<4x1xf32>,
      %cst_39 = arith.constant 0.000000e+00 : f32
      %62 = vector.broadcast %cst_39 : f32 to vector<4x1xf32>
      %c0_40 = arith.constant 0 : index
      %c0_41 = arith.constant 0 : index
      %63 = vector.load %arg7[%c0_40, %c0_41] : memref<4x1xf32, #tpu.memory_space<vmem>>, vector<4x1xf32>
      tpu.vector_store %arg7[%c0_40, %c0_41], %62 {strides = array<i32>} : memref<4x1xf32, #tpu.memory_space<vmem>>, vector<4x1xf32>,
    } else {
    }
    %c0 = arith.constant 0 : index
    %c0_1 = arith.constant 0 : index
    %c0_2 = arith.constant 0 : index
    %3 = vector.load %arg2[%c0, %c0_1, %c0_2] : memref<1x4x256xf32, #tpu.memory_space<vmem>>, vector<1x4x256xf32>
    %4 = vector.shape_cast %3 : vector<1x4x256xf32> to vector<4x256xf32>
    %c0_3 = arith.constant 0 : index
    %c0_4 = arith.constant 0 : index
    %c0_5 = arith.constant 0 : index
    %5 = vector.load %arg3[%c0_3, %c0_4, %c0_5] : memref<1x4x256xf32, #tpu.memory_space<vmem>>, vector<1x4x256xf32>
    %6 = vector.shape_cast %5 : vector<1x4x256xf32> to vector<4x256xf32>
    %cst = arith.constant 5.000000e-01 : f32
    %7 = vector.broadcast %cst : f32 to vector<4x256xf32>
    %8 = arith.cmpf ogt, %6, %7 : vector<4x256xf32>
    %cst_6 = arith.constant -1.000000e+00 : f32
    %9 = vector.broadcast %cst_6 : f32 to vector<4x256xf32>
    %10 = arith.cmpf one, %6, %9 : vector<4x256xf32>
    %11 = arith.extui %10 : vector<4x256xi1> to vector<4x256xi32>
    %12 = arith.sitofp %11 : vector<4x256xi32> to vector<4x256xf32>
    %13 = arith.negf %4 : vector<4x256xf32>
    %14 = math.exp %13 : vector<4x256xf32>
    %cst_7 = arith.constant 1.000000e+00 : f32
    %15 = vector.broadcast %cst_7 : f32 to vector<4x256xf32>
    %16 = arith.addf %15, %14 : vector<4x256xf32>
    %17 = arith.divf %15, %16 : vector<4x256xf32>
    %cst_8 = arith.constant 2.500000e-01 : f32
    %cst_9 = arith.constant 7.500000e-01 : f32
    %18 = vector.broadcast %cst_8 : f32 to vector<4x256xf32>
    %19 = vector.broadcast %cst_9 : f32 to vector<4x256xf32>
    %20 = arith.select %8, %18, %19 : vector<4x256xi1>, vector<4x256xf32>
    %21 = arith.mulf %12, %20 : vector<4x256xf32>
    %22 = arith.subf %6, %17 : vector<4x256xf32>
    %23 = math.absf %22 : vector<4x256xf32>
    %cst_10 = arith.constant 1.000000e+00 : f32
    %24 = vector.broadcast %cst_10 : f32 to vector<4x256xf32>
    %25 = arith.subf %24, %23 : vector<4x256xf32>
    %cst_11 = arith.constant 1.000000e+00 : f32
    %26 = vector.broadcast %cst_11 : f32 to vector<4x256xf32>
    %27 = arith.select %10, %25, %26 : vector<4x256xi1>, vector<4x256xf32>
    %cst_12 = arith.constant 1.000000e+00 : f32
    %28 = vector.broadcast %cst_12 : f32 to vector<4x256xf32>
    %29 = arith.subf %28, %27 : vector<4x256xf32>
    %30 = arith.mulf %29, %29 : vector<4x256xf32>
    %cst_13 = arith.constant 9.99999996E-13 : f32
    %31 = vector.broadcast %cst_13 : f32 to vector<4x256xf32>
    %32 = arith.addf %27, %31 : vector<4x256xf32>
    %cst_14 = arith.constant 1.000000e+00 : f32
    %33 = vector.broadcast %cst_14 : f32 to vector<4x256xf32>
    %34 = arith.minimumf %32, %33 : vector<4x256xf32>
    %35 = math.log %34 : vector<4x256xf32>
    %cst_15 = arith.constant 0.000000e+00 : f32
    %36 = vector.broadcast %cst_15 : f32 to vector<4x256xf32>
    %37 = arith.subf %36, %21 : vector<4x256xf32>
    %38 = arith.mulf %37, %30 : vector<4x256xf32>
    %39 = arith.mulf %38, %35 : vector<4x256xf32>
    %c0_16 = arith.constant 0 : index
    %c0_17 = arith.constant 0 : index
    %40 = vector.load %arg5[%c0_16, %c0_17] : memref<4x1xf32, #tpu.memory_space<vmem>>, vector<4x1xf32>
    %cst_18 = arith.constant dense<0.000000e+00> : vector<4xf32>
    %41 = vector.multi_reduction <add>, %39, %cst_18 [1] : vector<4x256xf32> to vector<4xf32>
    %42 = vector.shape_cast %41 : vector<4xf32> to vector<4x1xf32>
    %43 = arith.addf %40, %42 : vector<4x1xf32>
    %c0_19 = arith.constant 0 : index
    %c0_20 = arith.constant 0 : index
    %44 = vector.load %arg5[%c0_19, %c0_20] : memref<4x1xf32, #tpu.memory_space<vmem>>, vector<4x1xf32>
    tpu.vector_store %arg5[%c0_19, %c0_20], %43 {strides = array<i32>} : memref<4x1xf32, #tpu.memory_space<vmem>>, vector<4x1xf32>,
    %c0_21 = arith.constant 0 : index
    %c0_22 = arith.constant 0 : index
    %45 = vector.load %arg6[%c0_21, %c0_22] : memref<4x1xf32, #tpu.memory_space<vmem>>, vector<4x1xf32>
    %cst_23 = arith.constant dense<0.000000e+00> : vector<4xf32>
    %46 = vector.multi_reduction <add>, %30, %cst_23 [1] : vector<4x256xf32> to vector<4xf32>
    %47 = vector.shape_cast %46 : vector<4xf32> to vector<4x1xf32>
    %48 = arith.addf %45, %47 : vector<4x1xf32>
    %c0_24 = arith.constant 0 : index
    %c0_25 = arith.constant 0 : index
    %49 = vector.load %arg6[%c0_24, %c0_25] : memref<4x1xf32, #tpu.memory_space<vmem>>, vector<4x1xf32>
    tpu.vector_store %arg6[%c0_24, %c0_25], %48 {strides = array<i32>} : memref<4x1xf32, #tpu.memory_space<vmem>>, vector<4x1xf32>,
    %c0_26 = arith.constant 0 : index
    %c0_27 = arith.constant 0 : index
    %50 = vector.load %arg7[%c0_26, %c0_27] : memref<4x1xf32, #tpu.memory_space<vmem>>, vector<4x1xf32>
    %cst_28 = arith.constant dense<0.000000e+00> : vector<4xf32>
    %51 = vector.multi_reduction <add>, %12, %cst_28 [1] : vector<4x256xf32> to vector<4xf32>
    %52 = vector.shape_cast %51 : vector<4xf32> to vector<4x1xf32>
    %53 = arith.addf %50, %52 : vector<4x1xf32>
    %c0_29 = arith.constant 0 : index
    %c0_30 = arith.constant 0 : index
    %54 = vector.load %arg7[%c0_29, %c0_30] : memref<4x1xf32, #tpu.memory_space<vmem>>, vector<4x1xf32>
    tpu.vector_store %arg7[%c0_29, %c0_30], %53 {strides = array<i32>} : memref<4x1xf32, #tpu.memory_space<vmem>>, vector<4x1xf32>,
    %c0_i32_31 = arith.constant 0 : i32
    %55 = arith.cmpi eq, %arg1, %c0_i32_31 : i32
    %56 = arith.extui %55 : i1 to i32
    %c0_i32_32 = arith.constant 0 : i32
    %57 = arith.cmpi ne, %56, %c0_i32_32 : i32
    scf.if %57 {
      %c0_33 = arith.constant 0 : index
      %c0_34 = arith.constant 0 : index
      %58 = vector.load %arg5[%c0_33, %c0_34] : memref<4x1xf32, #tpu.memory_space<vmem>>, vector<4x1xf32>
      %c0_35 = arith.constant 0 : index
      %c0_36 = arith.constant 0 : index
      %59 = vector.load %arg6[%c0_35, %c0_36] : memref<4x1xf32, #tpu.memory_space<vmem>>, vector<4x1xf32>
      %c0_37 = arith.constant 0 : index
      %c0_38 = arith.constant 0 : index
      %60 = vector.load %arg7[%c0_37, %c0_38] : memref<4x1xf32, #tpu.memory_space<vmem>>, vector<4x1xf32>
      %cst_39 = arith.constant 9.99999996E-13 : f32
      %61 = vector.broadcast %cst_39 : f32 to vector<4x1xf32>
      %62 = arith.addf %59, %61 : vector<4x1xf32>
      %63 = arith.divf %60, %62 : vector<4x1xf32>
      %64 = arith.mulf %58, %63 : vector<4x1xf32>
      %65 = vector.shape_cast %64 : vector<4x1xf32> to vector<1x4x1xf32>
      %cst_40 = arith.constant dense<0.000000e+00> : vector<1xf32>
      %66 = vector.multi_reduction <add>, %65, %cst_40 [1, 2] : vector<1x4x1xf32> to vector<1xf32>
      %67 = vector.shape_cast %66 : vector<1xf32> to vector<1x1x1xf32>
      %68 = vector.extract %67[0, 0, 0] : f32 from vector<1x1x1xf32>
      %69 = vector.shape_cast %60 : vector<4x1xf32> to vector<1x4x1xf32>
      %cst_41 = arith.constant dense<0.000000e+00> : vector<1xf32>
      %70 = vector.multi_reduction <add>, %69, %cst_41 [1, 2] : vector<1x4x1xf32> to vector<1xf32>
      %71 = vector.shape_cast %70 : vector<1xf32> to vector<1x1x1xf32>
      %72 = vector.extract %71[0, 0, 0] : f32 from vector<1x1x1xf32>
      %cst_42 = arith.constant 1.000000e+00 : f32
      %73 = arith.mulf %cst_42, %68 : f32
      %cst_43 = arith.constant 9.99999996E-13 : f32
      %74 = arith.addf %72, %cst_43 : f32
      %75 = arith.divf %73, %74 : f32
      %76 = vector.broadcast %75 : f32 to vector<1x1x1xf32>
      %c0_44 = arith.constant 0 : index
      %c0_45 = arith.constant 0 : index
      %c0_46 = arith.constant 0 : index
      %77 = vector.load %arg4[%c0_44, %c0_45, %c0_46] : memref<1x1x1xf32, #tpu.memory_space<vmem>>, vector<1x1x1xf32>
      tpu.vector_store %arg4[%c0_44, %c0_45, %c0_46], %76 {strides = array<i32>} : memref<1x1x1xf32, #tpu.memory_space<vmem>>, vector<1x1x1xf32>,
    } else {
    }
    return
  }
  func.func @transform_0(%arg0: i32, %arg1: i32) -> (i32, i32, i32) {
    %c0_i32 = arith.constant 0 : i32
    %c0_i32_0 = arith.constant 0 : i32
    return %arg0, %c0_i32, %arg1 : i32, i32, i32
  }
  func.func @transform_1(%arg0: i32, %arg1: i32) -> (i32, i32, i32) {
    %c0_i32 = arith.constant 0 : i32
    %c0_i32_0 = arith.constant 0 : i32
    return %arg0, %c0_i32, %arg1 : i32, i32, i32
  }
  func.func @transform_2(%arg0: i32, %arg1: i32) -> (i32, i32, i32) {
    %c0_i32 = arith.constant 0 : i32
    %c0_i32_0 = arith.constant 0 : i32
    %c0_i32_1 = arith.constant 0 : i32
    return %arg0, %c0_i32, %c0_i32_0 : i32, i32, i32
  }
}

</mosaic_0001>

<llo_original>
// kernel: tpu_custom_call.1
$region0: #{tpu_custom_call.1}
  #allocation0 [shape = 'u32[]', space=smem, size = 0x4, offset = 0x4, fixed_abs, tag = 'smem constant byte address 0x4 - core index']
  #allocation1 [shape = 'u32[144,128]{1,0:T(1,128)}', space=vmem, size = 0x12000, scoped, tag = 'internal scratch']
  #allocation2 [shape = 'f32[4,1]{1,0:T(4,128)}', space=vmem, size = 0x800, scoped, tag = 'scratch operand']
  #allocation3 [shape = 'f32[4,1]{1,0:T(4,128)}', space=vmem, size = 0x800, scoped, tag = 'scratch operand']
  #allocation4 [shape = 'f32[4,1]{1,0:T(4,128)}', space=vmem, size = 0x800, scoped, tag = 'scratch operand']
  %s0 = inlined_call_operand.hbm [shape: f32[2,4,256], index: 0, kind: input, shape index: {}]
  %s1 = inlined_call_operand.hbm [shape: f32[2,4,256], index: 1, kind: input, shape index: {}]
  %s2 = inlined_call_operand.vmem [shape: f32[2,1,1], index: 2, kind: output, shape index: {}]
  %s3 = sld [smem:[#allocation0]]
  $region57: #{tpu_custom_call.1} parent=0
    _
  %s5 = ssub.s32 1, %s3
  %s6 = scalar_select 0, %s5, %s3
  $region1: #{tpu_custom_call.1} parent=0
    #allocation5 [shape = 'u8[8192]{0}', space=vmem, size = 0x2000, scoped, tag = 'input window, operand 0']
    #allocation6 [shape = 's32[2]{0}', space=sflag, size = 0x8, scoped, tag = 'scoped memory for tpu_custom_call.1']
    #allocation7 [shape = 'u8[8192]{0}', space=vmem, size = 0x2000, scoped, tag = 'input window, operand 1']
    #allocation8 [shape = 's32[2]{0}', space=sflag, size = 0x8, scoped, tag = 'scoped memory for tpu_custom_call.1']
    %7 = vsyncpa [#allocation6], 0
    %s8 = scalar_lea.sflag [#allocation6], 1
    %9 = vsyncpa %s8, 0
    %10 = vsyncpa [#allocation8], 0
    %s11 = scalar_lea.sflag [#allocation8], 1
    %12 = vsyncpa %s11, 0
    loop: start=0, step=1, limit=4
    $region2: #{tpu_custom_call.1} parent=1 // loop_pre_header
      _
    $region3: #{tpu_custom_call.1} parent=1 // loop_header
      %s14 = sphi 0, %s18
      %p15 = scmp.ge.s32.totalorder %s14, 4
      %s21 = sphi 0, %s33
      %s22 = sphi 0, %s29
      %s23 = sphi 0, %s21
      %s24 = sphi 0, %s22
      %s25 = sphi 0, %s23
      %s26 = sphi 0, %s24
      %s38 = sphi 0, %s40
      %s41 = sphi 0, %s38
      %s42 = sphi 0, %s41
      %s58 = sphi 0, %s42
      %s66 = sphi 0, %s68
      %s69 = sphi 0, %s66
      %s70 = sphi 0, %s69
      %s86 = sphi 0, %s70
      %s92 = sphi 0, %s94
      %s95 = sphi 0, %s92
      %s96 = sphi 0, %s95
      %s112 = sphi 0, %s96
    $region4: #{tpu_custom_call.1} parent=1 // loop_header_branch
      %17 = sbr.rel (%p15) target = $region8
    $region5: #{tpu_custom_call.1} parent=1 // loop_body
      %s19 = ssub.s32 %s14, 1
      %s20 = ssub.s32 %s14, 2
      %s27 = sadd.s32 1, %s22
      %p28 = scmp.ge.s32.totalorder %s27, 1
      %s29 = scalar_select %p28, 0, %s27
      %s30 = sadd.s32 1, %s21
      %s31 = scalar_select %p28, %s30, %s21
      %p32 = scmp.ge.s32.totalorder %s31, 2
      %s33 = scalar_select %p32, 0, %s31
      %s34 = ssub.s32 %s21, %s33
      %s35 = ssub.s32 %s22, %s29
      %s36 = sor.u32 %s34, %s35
      %p37 = scmp.eq.s32.totalorder %s36, 0
      %s39 = sadd.s32 %s38, 1
      %s40 = scalar_select %p37, %s38, %s39
      %p43 = pneg %p37
      %p44 = scmp.eq.s32.totalorder %s14, 1
      %p45 = por %p43, %p44
      %p46 = scmp.ne.s32.totalorder %s38, %s41
      %p47 = scmp.eq.s32.totalorder %s14, 0
      %p48 = por %p46, %p47
      %p49 = scmp.ne.s32.totalorder %s38, %s41
      %p50 = scmp.eq.s32.totalorder %s19, 1
      %p51 = por %p49, %p50
      %p52 = scmp.ne.s32.totalorder %s41, %s42
      %p53 = scmp.eq.s32.totalorder %s19, 0
      %p54 = por %p52, %p53
      %p55 = scmp.ne.s32.totalorder %s41, %s42
      %p56 = scmp.eq.s32.totalorder %s20, 1
      %p57 = por %p55, %p56
      %p59 = scmp.ne.s32.totalorder %s42, %s58
      %p60 = scmp.eq.s32.totalorder %s20, 0
      %p61 = por %p59, %p60
      %s62 = ssub.s32 %s21, %s33
      %s63 = ssub.s32 %s22, %s29
      %s64 = sor.u32 %s62, %s63
      %p65 = scmp.eq.s32.totalorder %s64, 0
      %s67 = sadd.s32 %s66, 1
      %s68 = scalar_select %p65, %s66, %s67
      %p71 = pneg %p65
      %p72 = scmp.eq.s32.totalorder %s14, 1
      %p73 = por %p71, %p72
      %p74 = scmp.ne.s32.totalorder %s66, %s69
      %p75 = scmp.eq.s32.totalorder %s14, 0
      %p76 = por %p74, %p75
      %p77 = scmp.ne.s32.totalorder %s66, %s69
      %p78 = scmp.eq.s32.totalorder %s19, 1
      %p79 = por %p77, %p78
      %p80 = scmp.ne.s32.totalorder %s69, %s70
      %p81 = scmp.eq.s32.totalorder %s19, 0
      %p82 = por %p80, %p81
      %p83 = scmp.ne.s32.totalorder %s69, %s70
      %p84 = scmp.eq.s32.totalorder %s20, 1
      %p85 = por %p83, %p84
      %p87 = scmp.ne.s32.totalorder %s70, %s86
      %p88 = scmp.eq.s32.totalorder %s20, 0
      %p89 = por %p87, %p88
      %s90 = ssub.s32 %s21, %s33
      %p91 = scmp.eq.s32.totalorder %s90, 0
      %s93 = sadd.s32 %s92, 1
      %s94 = scalar_select %p91, %s92, %s93
      %p97 = pneg %p91
      %p98 = scmp.eq.s32.totalorder %s14, 1
      %p99 = por %p97, %p98
      %p100 = scmp.ne.s32.totalorder %s92, %s95
      %p101 = scmp.eq.s32.totalorder %s14, 0
      %p102 = por %p100, %p101
      %p103 = scmp.ne.s32.totalorder %s92, %s95
      %p104 = scmp.eq.s32.totalorder %s19, 1
      %p105 = por %p103, %p104
      %p106 = scmp.ne.s32.totalorder %s95, %s96
      %p107 = scmp.eq.s32.totalorder %s19, 0
      %p108 = por %p106, %p107
      %p109 = scmp.ne.s32.totalorder %s95, %s96
      %p110 = scmp.eq.s32.totalorder %s20, 1
      %p111 = por %p109, %p110
      %p113 = scmp.ne.s32.totalorder %s96, %s112
      %p114 = scmp.eq.s32.totalorder %s20, 0
      %p115 = por %p113, %p114
      %p116 = scmp.le.s32.totalorder 1, %s14
      %p117 = scmp.lt.s32.totalorder %s14, 3
      %p118 = pnand %p116, %p117
      %p119 = pneg %p118
      // Predicated region
      $region9: #{tpu_custom_call.1} parent=5 // pred_check
        _
      $region10: #{tpu_custom_call.1} parent=5 // pred_check_branch
        %121 = sbr.rel (%p118) target = $region12
      $region11: #{tpu_custom_call.1} parent=5 // pred_region
        %s122 = ssub.s32 %s14, 1
      $region12: #{tpu_custom_call.1} parent=5 // pred_fallthru
        _
      %p123 = scmp.lt.s32.totalorder %s14, 2
      // Predicated region
      $region13: #{tpu_custom_call.1} parent=5 // pred_check
        %p124 = pneg %p123
      $region14: #{tpu_custom_call.1} parent=5 // pred_check_branch
        %126 = sbr.rel (%p124) target = $region16
      $region15: #{tpu_custom_call.1} parent=5 // pred_region
        // Predicated region
        $region17: #{tpu_custom_call.1} parent=15 // pred_check
          %p127 = pneg %p48
        $region18: #{tpu_custom_call.1} parent=15 // pred_check_branch
          %129 = sbr.rel (%p127) target = $region20
        $region19: #{tpu_custom_call.1} parent=15 // pred_region
          %s130 = sand.u32 %s38, 1
          %s131 = scalar_lea.sflag [#allocation6], %s130
          %s132 = sand.u32 %s38, 1
          %s133 = smul.addr %s132, 8
          %s134 = scalar_lea.vmem [#allocation5], %s133
          %s135 = smul.u32 2, %s22
          %s137 = ssub.s32 128, 128
          %138 = vsyncadd %s131, %s137
          %s139 = smul.addr %s21, 2
          %s140 = sadd.s32 %s135, %s139
          %s141 = smul.addr %s140, 64
          %s142 = scalar_lea.hbm %s0, %s141
          %s144 = sshll.u32 %s134, 4
          %s145 = int_to_ptr.vmem [resolvable:$true] %s144
          %147 = dma.hbm_to_vmem [thread:$0]  %s142, 128, %s145, %s131
        $region20: #{tpu_custom_call.1} parent=15 // pred_fallthru
          _
        // Predicated region
        $region21: #{tpu_custom_call.1} parent=15 // pred_check
          %p148 = pneg %p76
        $region22: #{tpu_custom_call.1} parent=15 // pred_check_branch
          %150 = sbr.rel (%p148) target = $region24
        $region23: #{tpu_custom_call.1} parent=15 // pred_region
          %s151 = sand.u32 %s66, 1
          %s152 = scalar_lea.sflag [#allocation8], %s151
          %s153 = sand.u32 %s66, 1
          %s154 = smul.addr %s153, 8
          %s155 = scalar_lea.vmem [#allocation7], %s154
          %s156 = smul.u32 2, %s22
          %s158 = ssub.s32 128, 128
          %159 = vsyncadd %s152, %s158
          %s160 = smul.addr %s21, 2
          %s161 = sadd.s32 %s156, %s160
          %s162 = smul.addr %s161, 64
          %s163 = scalar_lea.hbm %s1, %s162
          %s165 = sshll.u32 %s155, 4
          %s166 = int_to_ptr.vmem [resolvable:$true] %s165
          %168 = dma.hbm_to_vmem [thread:$0]  %s163, 128, %s166, %s152
        $region24: #{tpu_custom_call.1} parent=15 // pred_fallthru
          _
      $region16: #{tpu_custom_call.1} parent=5 // pred_fallthru
        _
      %p169 = scmp.le.s32.totalorder 1, %s14
      %p170 = scmp.lt.s32.totalorder %s14, 3
      %p171 = pnand %p169, %p170
      %p172 = pneg %p171
      // Predicated region
      $region25: #{tpu_custom_call.1} parent=5 // pred_check
        _
      $region26: #{tpu_custom_call.1} parent=5 // pred_check_branch
        %174 = sbr.rel (%p171) target = $region28
      $region27: #{tpu_custom_call.1} parent=5 // pred_region
        %s175 = ssub.s32 %s14, 1
        %s176 = sand.u32 %s41, 1
        %s177 = scalar_lea.sflag [#allocation6], %s176
        %s178 = sand.u32 %s41, 1
        %s179 = smul.addr %s178, 8
        %s180 = scalar_lea.vmem [#allocation5], %s179
        // Predicated region
        $region29: #{tpu_custom_call.1} parent=27 // pred_check
          %p181 = pneg %p54
        $region30: #{tpu_custom_call.1} parent=27 // pred_check_branch
          %183 = sbr.rel (%p181) target = $region32
        $region31: #{tpu_custom_call.1} parent=27 // pred_region
          %184 = dma.done %s177, 128
        $region32: #{tpu_custom_call.1} parent=27 // pred_fallthru
          _
        %s185 = sand.u32 %s69, 1
        %s186 = scalar_lea.sflag [#allocation8], %s185
        %s187 = sand.u32 %s69, 1
        %s188 = smul.addr %s187, 8
        %s189 = scalar_lea.vmem [#allocation7], %s188
        // Predicated region
        $region33: #{tpu_custom_call.1} parent=27 // pred_check
          %p190 = pneg %p82
        $region34: #{tpu_custom_call.1} parent=27 // pred_check_branch
          %192 = sbr.rel (%p190) target = $region36
        $region35: #{tpu_custom_call.1} parent=27 // pred_region
          %193 = dma.done %s186, 128
        $region36: #{tpu_custom_call.1} parent=27 // pred_fallthru
          _
        %s194 = sand.u32 %s41, 1
        %s195 = scalar_lea.sflag [#allocation6], %s194
        %s196 = sand.u32 %s41, 1
        %s197 = smul.addr %s196, 8
        %s198 = scalar_lea.vmem [#allocation5], %s197
        %p199 = pneg %p54
        %p200 = pneg %p51
        %s201 = sand.u32 %s69, 1
        %s202 = scalar_lea.sflag [#allocation8], %s201
        %s203 = sand.u32 %s69, 1
        %s204 = smul.addr %s203, 8
        %s205 = scalar_lea.vmem [#allocation7], %s204
        %p206 = pneg %p82
        %p207 = pneg %p79
        %p208 = pneg %p108
        %p209 = pneg %p105
        %p210 = scmp.lt.s32.totalorder %s23, 1
        %s211 = scalar_select %p210, %s23, 1
        %s212 = scalar_lea.vmem %s2, %s211
        %s213 = smul.u32 2, %s24
        %s214 = smul.u32 2, %s24
        %p215 = scmp.lt.s32.totalorder %s23, 1
        %s216 = scalar_select %p215, %s23, 1
        %s217 = scalar_lea.vmem %s2, %s216
        %p218 = scmp.eq.s32.totalorder %s24, 0
        // Predicated region
        $region37: #{tpu_custom_call.1} parent=27 // pred_check
          %p219 = pneg %p218
        $region38: #{tpu_custom_call.1} parent=27 // pred_check_branch
          %221 = sbr.rel (%p219) target = $region40
        $region39: #{tpu_custom_call.1} parent=27 // pred_region
          %vm222 = vcmask 3072
          %223 = vst.msk [vmem:[#allocation2] sm:$0xf] %vm222, 0.0
          %224 = vst.msk [vmem:[#allocation3] sm:$0xf] %vm222, 0.0
          %225 = vst.msk [vmem:[#allocation4] sm:$0xf] %vm222, 0.0
        $region40: #{tpu_custom_call.1} parent=27 // pred_fallthru
          _
        %v226 = vld [vmem:[%s180] sm:$0xff]
        %v227 = vld [vmem:[%s189] sm:$0xff]
        %vm228 = vcmp.gt.f32.partialorder %v227, 0.5
        %vm229 = vcmp.ne.f32.partialorder %v227, -1.0
        %v230 = vsel %vm229, 1, 0
        %v231 = vcvt.s32.f32 %v230
        %v232 = vxor.u32 %v226, 2147483648
        %v233 = vmul.f32 %v232, 1.442695
        %v234 = vpow.pop %v233
        %v235 = vadd.f32 %v234, 1.0
        %v236 = vrcp.pop %v235
        %v237 = vmul.f32 1.0, %v236
        %v238 = vsel %vm228, 0.25, 0.75
        %v239 = vmul.f32 %v231, %v238
        %v240 = vsub.f32 %v227, %v237
        %v241 = vand.u32 2147483647, %v240
        %v242 = vsub.f32 1.0, %v241
        %v243 = vsel %vm229, %v242, 1.0
        %v244 = vsub.f32 1.0, %v243
        %v245 = vmul.f32 %v244, %v244
        %v246 = vadd.f32 %v243, 1e-12
        %v247 = vmin.f32 %v246, 1.0
        %v248 = vlog2.pop %v247
        %v249 = vmul.f32 %v248, 0.6931472
        %v250 = vsub.f32 0.0, %v239
        %v251 = vmul.f32 %v250, %v245
        %v252 = vmul.f32 %v251, %v249
        %v253 = vld [vmem:[#allocation2] sm:$0xf]
        %v255 = vcombine.high %v252, %v252
        %vm257 = vcmask 1043456
        %v258 = vsel %vm257, %v252, 0.0
        %v259 = vsel %vm257, %v255, 0.0
        %v260 = vadd.f32 %v258, %v259
        %261 = vadd.xlane.f32.xlu0 %v260
        %v262 = vpop.xlane.xlu0 %261
        %v263 = vadd.f32 %v253, %v262
        %vm264 = vcmask 3072
        %265 = vst.msk [vmem:[#allocation2] sm:$0xf] %vm264, %v263
        %v266 = vld [vmem:[#allocation3] sm:$0xf]
        %v268 = vcombine.high %v245, %v245
        %v270 = vsel %vm257, %v245, 0.0
        %v271 = vsel %vm257, %v268, 0.0
        %v272 = vadd.f32 %v270, %v271
        %273 = vadd.xlane.f32.xlu0 %v272
        %v274 = vpop.xlane.xlu0 %273
        %v275 = vadd.f32 %v266, %v274
        %276 = vst.msk [vmem:[#allocation3] sm:$0xf] %vm264, %v275
        %v277 = vld [vmem:[#allocation4] sm:$0xf]
        %v279 = vcombine.high %v231, %v231
        %v281 = vsel %vm257, %v231, 0.0
        %v282 = vsel %vm257, %v279, 0.0
        %v283 = vadd.f32 %v281, %v282
        %284 = vadd.xlane.f32.xlu0 %v283
        %v285 = vpop.xlane.xlu0 %284
        %v286 = vadd.f32 %v277, %v285
        %287 = vst.msk [vmem:[#allocation4] sm:$0xf] %vm264, %v286
        // Predicated region
        $region41: #{tpu_custom_call.1} parent=27 // pred_check
          %p288 = pneg %p218
        $region42: #{tpu_custom_call.1} parent=27 // pred_check_branch
          %290 = sbr.rel (%p288) target = $region44
        $region43: #{tpu_custom_call.1} parent=27 // pred_region
          %v291 = vld [vmem:[#allocation2] sm:$0xf]
          %v292 = vld [vmem:[#allocation3] sm:$0xf]
          %v293 = vld [vmem:[#allocation4] sm:$0xf]
          %v294 = vadd.f32 %v292, 1e-12
          %v295 = vrcp.pop %v294
          %v296 = vmul.f32 %v293, %v295
          %v297 = vmul.f32 %v291, %v296
          %v298 = vsel %vm264, %v297, 0.0
          %299 = vadd.xlane.f32.xlu0 %v298
          %v300 = vpop.xlane.xlu0 %299
          %v301 = vrot.slane %v300, 4
          %v302 = vadd.f32 %v300, %v301
          %v303 = vrot.slane %v302, 2
          %v304 = vadd.f32 %v302, %v303
          %v305 = vrot.slane %v304, 1
          %v306 = vadd.f32 %v304, %v305
          %s307 = vtos %v306
          %v308 = vsel %vm264, %v293, 0.0
          %309 = vadd.xlane.f32.xlu0 %v308
          %v310 = vpop.xlane.xlu0 %309
          %v311 = vrot.slane %v310, 4
          %v312 = vadd.f32 %v310, %v311
          %v313 = vrot.slane %v312, 2
          %v314 = vadd.f32 %v312, %v313
          %v315 = vrot.slane %v314, 1
          %v316 = vadd.f32 %v314, %v315
          %s317 = vtos %v316
          %s318 = sadd.f32 %s317, 1e-12
          %v319 = vstv %s318
          %v320 = vrcp.pop %v319
          %s321 = vtos %v320
          %s322 = smul.f32 %s307, %s321
          %v323 = vstv %s322
          %vm324 = vcmask 0
          %325 = vst.msk [vmem:[%s217] sm:$0x1] %vm324, %v323
        $region44: #{tpu_custom_call.1} parent=27 // pred_fallthru
          _
        %p326 = scmp.lt.s32.totalorder %s23, 1
        %s327 = scalar_select %p326, %s23, 1
        %s328 = scalar_lea.vmem %s2, %s327
        // Predicated region
        $region45: #{tpu_custom_call.1} parent=27 // pred_check
          %p329 = pneg %p105
        $region46: #{tpu_custom_call.1} parent=27 // pred_check_branch
          %331 = sbr.rel (%p329) target = $region48
        $region47: #{tpu_custom_call.1} parent=27 // pred_region
          _
        $region48: #{tpu_custom_call.1} parent=27 // pred_fallthru
          _
      $region28: #{tpu_custom_call.1} parent=5 // pred_fallthru
        _
      %p332 = scmp.le.s32.totalorder 2, %s14
      // Predicated region
      $region49: #{tpu_custom_call.1} parent=5 // pred_check
        %p333 = pneg %p332
      $region50: #{tpu_custom_call.1} parent=5 // pred_check_branch
        %335 = sbr.rel (%p333) target = $region52
      $region51: #{tpu_custom_call.1} parent=5 // pred_region
        %s336 = ssub.s32 %s14, 2
        // Predicated region
        $region53: #{tpu_custom_call.1} parent=51 // pred_check
          %p337 = pneg %p111
        $region54: #{tpu_custom_call.1} parent=51 // pred_check_branch
          %339 = sbr.rel (%p337) target = $region56
        $region55: #{tpu_custom_call.1} parent=51 // pred_region
          %p340 = scmp.lt.s32.totalorder %s25, 1
          %s341 = scalar_select %p340, %s25, 1
          %s342 = scalar_lea.vmem %s2, %s341
        $region56: #{tpu_custom_call.1} parent=51 // pred_fallthru
          _
      $region52: #{tpu_custom_call.1} parent=5 // pred_fallthru
        _
    $region6: #{tpu_custom_call.1} parent=1 // loop_footer
      %s18 = sadd.s32 1, %s14
    $region7: #{tpu_custom_call.1} parent=1 // loop_footer_branch
      %13 = sbr.rel target = $region3
    $region8: #{tpu_custom_call.1} parent=1 // loop_exit
      _
    %343 = vsyncpa [#allocation6], 1
    %s344 = scalar_lea.sflag [#allocation6], 1
    %345 = vsyncpa %s344, 1
    %346 = vsyncpa [#allocation8], 1
    %s347 = scalar_lea.sflag [#allocation8], 1
    %348 = vsyncpa %s347, 1

</llo_original>
